<compile_context>
chip_gen: v7x
topology: tpu7x:2x2x1
jax: 0.10.0
libtpu: 0.0.40
codegen_flags: <defaults>
</compile_context>

<pallas_src>
import jax
import jax.numpy as jnp
from jax.experimental import pallas as pl
from jax.experimental.pallas import tpu as pltpu


def _patch_embed_kernel(x_ref, w_ref, b_ref, cls_ref, o_ref, acc_ref):
    """Projects one image's patches and writes [cls ; patches @ W + b] in place.

    Two static layouts (chosen by the wrapper from the patch size):
      fused : x_ref (1, seq+1, K)   w_ref (K, D)     -- row 0 of x is a zero pad row
      chans : x_ref (1, C, seq, P)  w_ref (C, P, D)  -- transpose-free, P >= 128
    b_ref / cls_ref: (1, D).  o_ref: (1, seq+1, D).  acc_ref: VMEM f32 scratch.
    """
    if len(x_ref.shape) == 3:
        # --- fused-K path: one MXU contraction over K = C*P (review #1). ---
        acc_ref[...] = jnp.dot(x_ref[0], w_ref[...],
                               preferred_element_type=jnp.float32)
        rows, d = acc_ref.shape
        out = acc_ref[...] + b_ref[...]                     # (seq+1, D); row 0 = bias only
        # Row 0 of the padded input is zero, so overwrite it with the cls token and emit
        # ONE aligned full-block store (no unaligned sublane stores, no wrapper concat
        # pass over HBM).
        is_cls = jax.lax.broadcasted_iota(jnp.int32, (rows, d), 0) == 0
        out = jnp.where(is_cls, jnp.broadcast_to(cls_ref[...], (rows, d)), out)
        o_ref[0] = out.astype(o_ref.dtype)
    else:
        # --- transpose-free path (P >= 128): C per-channel K=P dots accumulated in a
        #     VMEM f32 scratch (review #2 fallback; no vreg-resident accumulator). ---
        nchan = x_ref.shape[1]
        acc_ref[...] = jnp.zeros_like(acc_ref)
        for c in range(nchan):                              # static unroll, C is small
            acc_ref[...] += jnp.dot(x_ref[0, c], w_ref[c],
                                    preferred_element_type=jnp.float32)
        # Write cls row + projection straight into the final buffer; the projection
        # store lands at (static) sublane offset 1, which is still far cheaper than a
        # separate HBM concat pass.
        o_ref[0, 0:1, :] = cls_ref[...].astype(o_ref.dtype)
        o_ref[0, 1:, :] = (acc_ref[...] + b_ref[...]).astype(o_ref.dtype)


def patch_embedding_forward(img, w, b, cls_tok, patch, *, out_dtype=None):
    """img: (N, C, H, W); w: (C*patch^2, d_model); b: (d_model,); cls_tok: (1, d_model).

    Returns (N, seq + 1, d_model) = concat([cls, Linear(patches)], axis=1).
    """
    N, C, H, W = img.shape
    P = patch * patch
    img_size = H * W
    assert img_size % P == 0, "img is not divisible with patch"
    seq = img_size // P
    K = C * P
    assert w.shape[0] == K, (w.shape, K)
    D = w.shape[1]
    out_dtype = out_dtype or img.dtype   # pass jnp.bfloat16 to halve output HBM traffic

    b2 = b.reshape(1, D).astype(jnp.float32)
    cls2 = cls_tok.reshape(1, D).astype(jnp.float32)

    if P < 128:
        # Small patches: the P minor dim would be lane-padded P -> 128 in VMEM and each
        # channel dot would have tiny K.  Do the one-time HBM rearrangement to a
        # lane-dense (N, seq, K) LHS (review: "x-tile layout" item), plus a zero row per
        # image so the kernel output is a single aligned full-block store.
        x = img.reshape(N, C, seq, P)
        x = jnp.transpose(x, (0, 2, 1, 3)).reshape(N, seq, K)   # matches torch permute/view
        x = jnp.pad(x, ((0, 0), (1, 0), (0, 0)))                # (N, seq+1, K), row 0 = 0
        wk = w                                                  # (K, D), resident
        in_specs = [
            pl.BlockSpec((1, seq + 1, K), lambda n: (n, 0, 0)),
            pl.BlockSpec((K, D), lambda n: (0, 0)),             # constant index -> 1 DMA
            pl.BlockSpec((1, D), lambda n: (0, 0)),
            pl.BlockSpec((1, D), lambda n: (0, 0)),
        ]
        acc_shape = (seq + 1, D)
        x_block_bytes = (seq + 1) * K * img.dtype.itemsize
    else:
        # Large patches: P is already lane-dense, so skip the HBM transpose entirely and
        # fuse the (c, p) -> K rearrangement into C accumulated MXU dots.
        x = img.reshape(N, C, seq, P)                           # free, contiguous reshape
        wk = w.reshape(C, P, D)                                 # row c*P + p matches torch
        in_specs = [
            pl.BlockSpec((1, C, seq, P), lambda n: (n, 0, 0, 0)),
            pl.BlockSpec((C, P, D), lambda n: (0, 0, 0)),       # resident
            pl.BlockSpec((1, D), lambda n: (0, 0)),
            pl.BlockSpec((1, D), lambda n: (0, 0)),
        ]
        acc_shape = (seq, D)
        x_block_bytes = C * seq * P * img.dtype.itemsize

    out_itemsize = jnp.dtype(out_dtype).itemsize
    w_bytes = int(wk.size) * wk.dtype.itemsize
    out_block_bytes = (seq + 1) * D * out_itemsize
    acc_bytes = acc_shape[0] * acc_shape[1] * 4

    # Double-buffered per-image x/out blocks + resident weight/bias/cls + scratch.
    vmem_need = 2 * (x_block_bytes + out_block_bytes) + w_bytes + acc_bytes \
        + 4 * D * 4 + (2 << 20)
    cp_kwargs = dict(dimension_semantics=("parallel",))  # images shard across TCs (v7x)
    if vmem_need > 12 * (1 << 20):
        # Only kicks in for unusually large images; default scoped VMEM covers every
        # realistic patch-embedding shape.  Cap well under v7x's 64 MiB physical VMEM.
        cp_kwargs["vmem_limit_bytes"] = int(min(vmem_need, 48 * (1 << 20)))

    flops = 2 * N * seq * K * D                       # uses d_model, not a padded dim
    bytes_accessed = int(N * x_block_bytes + w_bytes + 2 * D * 4 + N * out_block_bytes)

    out = pl.pallas_call(
        _patch_embed_kernel,
        out_shape=jax.ShapeDtypeStruct((N, seq + 1, D), out_dtype),
        grid_spec=pltpu.PrefetchScalarGridSpec(
            num_scalar_prefetch=0,
            grid=(N,),                                # whole-image seq per grid step
            in_specs=in_specs,
            out_specs=pl.BlockSpec((1, seq + 1, D), lambda n: (n, 0, 0)),
            scratch_shapes=[pltpu.VMEM(acc_shape, jnp.float32)],
        ),
        compiler_params=pltpu.CompilerParams(**cp_kwargs),
        cost_estimate=pl.CostEstimate(flops=flops, transcendentals=0,
                                      bytes_accessed=bytes_accessed),
    )(x, wk, b2, cls2)
    return out


def patch_embedding_ref(img, w, b, cls_tok, patch):
    """Pure-JAX reference replicating the PyTorch view/split/stack/permute/linear/cat path."""
    N, C, H, W = img.shape
    P = patch * patch
    seq = (H * W) // P
    x = img.reshape(N, C, seq, P)
    x = jnp.transpose(x, (0, 2, 1, 3)).reshape(N, seq, C * P)
    proj = jnp.einsum("nsk,kd->nsd", x, w,
                      precision=jax.lax.Precision.HIGHEST) + b[None, None, :]
    cls = jnp.broadcast_to(cls_tok[None, :, :], (N, 1, w.shape[1]))
    return jnp.concatenate([cls, proj], axis=1)


if __name__ == "__main__":
    # Small shapes consistent with the module: height=16, width=16, channel=4,
    # patch=4, d_model=32  ->  P=16, seq=16, input_dim=64.
    N, C, H, W = 2, 4, 16, 16
    patch = 4
    d_model = 32
    P = patch * patch
    seq = (H * W) // P
    input_dim = P * C

    key = jax.random.PRNGKey(0)
    k_img, k_cls, k_w, k_b = jax.random.split(key, 4)

    img = jax.random.normal(k_img, (N, C, H, W), dtype=jnp.float32)
    cls_tok = jax.random.normal(k_cls, (1, d_model), dtype=jnp.float32)
    bound = 1.0 / (input_dim ** 0.5)
    w_t = jax.random.uniform(k_w, (d_model, input_dim),
                             minval=-bound, maxval=bound, dtype=jnp.float32)
    bias = jax.random.uniform(k_b, (d_model,),
                              minval=-bound, maxval=bound, dtype=jnp.float32)
    w = jnp.transpose(w_t)   # (input_dim, d_model) — nn.Linear stores (out, in)

    out = patch_embedding_forward(img, w, bias, cls_tok, patch)
    out = jax.block_until_ready(out)

    ref = patch_embedding_ref(img, w, bias, cls_tok, patch)
    assert out.shape == (N, seq + 1, d_model), out.shape
    # f32 operands + f32 accumulation; tolerance covers the MXU's default-precision
    # passes differing from the HIGHEST-precision XLA reference.
    assert jnp.allclose(out, ref, atol=2e-2, rtol=2e-2), "mismatch vs reference"

    # TODO(synk): self.ln (nn.LayerNorm) exists in __init__ but is never applied in
    # forward(), so it is intentionally not implemented here.
    print("KERNEL_OK")
</pallas_src>

<mosaic_0001>
module attributes {stable_mosaic.version = 11 : i64} {
  func.func @_patch_embed_kernel(%arg0: i32, %arg1: memref<1x17x64xf32, #tpu.memory_space<vmem>>, %arg2: memref<64x32xf32, #tpu.memory_space<vmem>>, %arg3: memref<1x32xf32, #tpu.memory_space<vmem>>, %arg4: memref<1x32xf32, #tpu.memory_space<vmem>>, %arg5: memref<1x17x32xf32, #tpu.memory_space<vmem>>, %arg6: memref<17x32xf32, #tpu.memory_space<vmem>>) attributes {dimension_semantics = [#tpu.dimension_semantics<parallel>], iteration_bounds = array<i64: 2>, scalar_prefetch = 0 : i64, scratch_operands = 1 : i64, tpu.core_type = #tpu.core_type<tc>, window_params = [{transform_indices = @transform_0, window_bounds = array<i64: 1, 17, 64>}, {pipeline_mode = #tpu.pipeline_mode<synchronous>, transform_indices = @transform_1, window_bounds = array<i64: 64, 32>}, {pipeline_mode = #tpu.pipeline_mode<synchronous>, transform_indices = @transform_2, window_bounds = array<i64: 1, 32>}, {pipeline_mode = #tpu.pipeline_mode<synchronous>, transform_indices = @transform_3, window_bounds = array<i64: 1, 32>}, {transform_indices = @transform_4, window_bounds = array<i64: 1, 17, 32>}]} {
    %c0 = arith.constant 0 : index
    %c0_0 = arith.constant 0 : index
    %c0_1 = arith.constant 0 : index
    %0 = vector.load %arg1[%c0, %c0_0, %c0_1] : memref<1x17x64xf32, #tpu.memory_space<vmem>>, vector<1x17x64xf32>
    %1 = vector.shape_cast %0 : vector<1x17x64xf32> to vector<17x64xf32>
    %c0_2 = arith.constant 0 : index
    %c0_3 = arith.constant 0 : index
    %2 = vector.load %arg2[%c0_2, %c0_3] : memref<64x32xf32, #tpu.memory_space<vmem>>, vector<64x32xf32>
    %cst = arith.constant dense<0.000000e+00> : vector<17x32xf32>
    %3 = tpu.matmul %1, %2, %cst {dimension_numbers = #tpu.dot_dimension_numbers<[1], [0], [0], [1], [0, 0, 1, 1], [], []>} : vector<17x64xf32>, vector<64x32xf32>, vector<17x32xf32> -> vector<17x32xf32>
    %c0_4 = arith.constant 0 : index
    %c0_5 = arith.constant 0 : index
    %4 = vector.load %arg6[%c0_4, %c0_5] : memref<17x32xf32, #tpu.memory_space<vmem>>, vector<17x32xf32>
    tpu.vector_store %arg6[%c0_4, %c0_5], %3 {strides = array<i32>} : memref<17x32xf32, #tpu.memory_space<vmem>>, vector<17x32xf32>,
    %c0_6 = arith.constant 0 : index
    %c0_7 = arith.constant 0 : index
    %5 = vector.load %arg6[%c0_6, %c0_7] : memref<17x32xf32, #tpu.memory_space<vmem>>, vector<17x32xf32>
    %c0_8 = arith.constant 0 : index
    %c0_9 = arith.constant 0 : index
    %6 = vector.load %arg3[%c0_8, %c0_9] : memref<1x32xf32, #tpu.memory_space<vmem>>, vector<1x32xf32>
    %7 = vector.broadcast %6 : vector<1x32xf32> to vector<17x32xf32>
    %8 = arith.addf %5, %7 : vector<17x32xf32>
    %9 = tpu.iota {dimensions = array<i32: 0>} : vector<17x32xi32>
    %c0_i32 = arith.constant 0 : i32
    %10 = vector.broadcast %c0_i32 : i32 to vector<17x32xi32>
    %11 = arith.cmpi eq, %9, %10 : vector<17x32xi32>
    %c0_10 = arith.constant 0 : index
    %c0_11 = arith.constant 0 : index
    %12 = vector.load %arg4[%c0_10, %c0_11] : memref<1x32xf32, #tpu.memory_space<vmem>>, vector<1x32xf32>
    %13 = vector.shape_cast %12 : vector<1x32xf32> to vector<1x32xf32>
    %14 = vector.broadcast %13 : vector<1x32xf32> to vector<17x32xf32>
    %15 = arith.select %11, %14, %8 : vector<17x32xi1>, vector<17x32xf32>
    %c0_12 = arith.constant 0 : index
    %c0_13 = arith.constant 0 : index
    %c0_14 = arith.constant 0 : index
    %16 = vector.load %arg5[%c0_12, %c0_13, %c0_14] : memref<1x17x32xf32, #tpu.memory_space<vmem>>, vector<1x17x32xf32>
    %17 = vector.shape_cast %16 : vector<1x17x32xf32> to vector<17x32xf32>
    %18 = vector.shape_cast %15 : vector<17x32xf32> to vector<1x17x32xf32>
    tpu.vector_store %arg5[%c0_12, %c0_13, %c0_14], %18 {strides = array<i32>} : memref<1x17x32xf32, #tpu.memory_space<vmem>>, vector<1x17x32xf32>,
    return
  }
  func.func @transform_0(%arg0: i32) -> (i32, i32, i32) {
    %c0_i32 = arith.constant 0 : i32
    %c0_i32_0 = arith.constant 0 : i32
    %c0_i32_1 = arith.constant 0 : i32
    return %arg0, %c0_i32, %c0_i32_0 : i32, i32, i32
  }
  func.func @transform_1(%arg0: i32) -> (i32, i32) {
    %c0_i32 = arith.constant 0 : i32
    %c0_i32_0 = arith.constant 0 : i32
    %c0_i32_1 = arith.constant 0 : i32
    return %c0_i32, %c0_i32_0 : i32, i32
  }
  func.func @transform_2(%arg0: i32) -> (i32, i32) {
    %c0_i32 = arith.constant 0 : i32
    %c0_i32_0 = arith.constant 0 : i32
    %c0_i32_1 = arith.constant 0 : i32
    return %c0_i32, %c0_i32_0 : i32, i32
  }
  func.func @transform_3(%arg0: i32) -> (i32, i32) {
    %c0_i32 = arith.constant 0 : i32
    %c0_i32_0 = arith.constant 0 : i32
    %c0_i32_1 = arith.constant 0 : i32
    return %c0_i32, %c0_i32_0 : i32, i32
  }
  func.func @transform_4(%arg0: i32) -> (i32, i32, i32) {
    %c0_i32 = arith.constant 0 : i32
    %c0_i32_0 = arith.constant 0 : i32
    %c0_i32_1 = arith.constant 0 : i32
    return %arg0, %c0_i32, %c0_i32_0 : i32, i32, i32
  }
}

</mosaic_0001>

<llo_original>
// kernel: tpu_custom_call.1
$region0: #{tpu_custom_call.1}
  #allocation0 [shape = 'u32[]', space=smem, size = 0x4, offset = 0x4, fixed_abs, tag = 'smem constant byte address 0x4 - core index']
  #allocation1 [shape = 'u32[144,128]{1,0:T(1,128)}', space=vmem, size = 0x12000, scoped, tag = 'internal scratch']
  #allocation2 [shape = 'f32[17,32]{1,0:T(8,128)}', space=vmem, size = 0x3000, scoped, tag = 'scratch operand']
  %s0 = inlined_call_operand.vmem [shape: f32[2,17,64], index: 0, kind: input, shape index: {}]
  %s1 = inlined_call_operand.vmem [shape: f32[64,32], index: 1, kind: input, shape index: {}]
  %s2 = inlined_call_operand.vmem [shape: f32[1,32], index: 2, kind: input, shape index: {}]
  %s3 = inlined_call_operand.vmem [shape: f32[1,32], index: 3, kind: input, shape index: {}]
  %s4 = inlined_call_operand.vmem [shape: f32[2,17,32], index: 4, kind: output, shape index: {}]
  %s5 = sld [smem:[#allocation0]]
  $region49: #{tpu_custom_call.1} parent=0
    _
  %s7 = ssub.s32 1, %s5
  %s8 = scalar_select 0, %s7, %s5
  loop: start=0, step=1, limit=4
  $region2: #{tpu_custom_call.1} parent=0 // loop_pre_header
    _
  $region3: #{tpu_custom_call.1} parent=0 // loop_header
    %s10 = sphi 0, %s14
    %p11 = scmp.ge.s32.totalorder %s10, 4
    %s20 = sphi 0, %s22
    %s23 = sphi 0, %s20
    %s24 = sphi 0, %s23
    %s40 = sphi 0, %s24
    %s44 = sphi 0, %s44
    %s46 = sphi 0, %s44
    %s47 = sphi 0, %s46
    %s61 = sphi 0, %s47
    %s65 = sphi 0, %s65
    %s67 = sphi 0, %s65
    %s68 = sphi 0, %s67
    %s82 = sphi 0, %s68
    %s86 = sphi 0, %s86
    %s88 = sphi 0, %s86
    %s89 = sphi 0, %s88
    %s103 = sphi 0, %s89
    %s109 = sphi 0, %s111
    %s112 = sphi 0, %s109
    %s113 = sphi 0, %s112
    %s129 = sphi 0, %s113
  $region4: #{tpu_custom_call.1} parent=0 // loop_header_branch
    %13 = sbr.rel (%p11) target = $region8
  $region5: #{tpu_custom_call.1} parent=0 // loop_body
    %s15 = ssub.s32 %s10, 1
    %s16 = ssub.s32 %s10, 2
    %s17 = sadd.s32 %s10, 1
    %s18 = ssub.s32 %s10, %s17
    %p19 = scmp.eq.s32.totalorder %s18, 0
    %s21 = sadd.s32 %s20, 1
    %s22 = scalar_select %p19, %s20, %s21
    %p25 = pneg %p19
    %p26 = scmp.eq.s32.totalorder %s10, 1
    %p27 = por %p25, %p26
    %p28 = scmp.ne.s32.totalorder %s20, %s23
    %p29 = scmp.eq.s32.totalorder %s10, 0
    %p30 = por %p28, %p29
    %p31 = scmp.ne.s32.totalorder %s20, %s23
    %p32 = scmp.eq.s32.totalorder %s15, 1
    %p33 = por %p31, %p32
    %p34 = scmp.ne.s32.totalorder %s23, %s24
    %p35 = scmp.eq.s32.totalorder %s15, 0
    %p36 = por %p34, %p35
    %p37 = scmp.ne.s32.totalorder %s23, %s24
    %p38 = scmp.eq.s32.totalorder %s16, 1
    %p39 = por %p37, %p38
    %p41 = scmp.ne.s32.totalorder %s24, %s40
    %p42 = scmp.eq.s32.totalorder %s16, 0
    %p43 = por %p41, %p42
    %s45 = sadd.s32 %s44, 1
    %p48 = scmp.eq.s32.totalorder %s10, 1
    %p49 = scmp.ne.s32.totalorder %s44, %s46
    %p50 = scmp.eq.s32.totalorder %s10, 0
    %p51 = por %p49, %p50
    %p52 = scmp.ne.s32.totalorder %s44, %s46
    %p53 = scmp.eq.s32.totalorder %s15, 1
    %p54 = por %p52, %p53
    %p55 = scmp.ne.s32.totalorder %s46, %s47
    %p56 = scmp.eq.s32.totalorder %s15, 0
    %p57 = por %p55, %p56
    %p58 = scmp.ne.s32.totalorder %s46, %s47
    %p59 = scmp.eq.s32.totalorder %s16, 1
    %p60 = por %p58, %p59
    %p62 = scmp.ne.s32.totalorder %s47, %s61
    %p63 = scmp.eq.s32.totalorder %s16, 0
    %p64 = por %p62, %p63
    %s66 = sadd.s32 %s65, 1
    %p69 = scmp.eq.s32.totalorder %s10, 1
    %p70 = scmp.ne.s32.totalorder %s65, %s67
    %p71 = scmp.eq.s32.totalorder %s10, 0
    %p72 = por %p70, %p71
    %p73 = scmp.ne.s32.totalorder %s65, %s67
    %p74 = scmp.eq.s32.totalorder %s15, 1
    %p75 = por %p73, %p74
    %p76 = scmp.ne.s32.totalorder %s67, %s68
    %p77 = scmp.eq.s32.totalorder %s15, 0
    %p78 = por %p76, %p77
    %p79 = scmp.ne.s32.totalorder %s67, %s68
    %p80 = scmp.eq.s32.totalorder %s16, 1
    %p81 = por %p79, %p80
    %p83 = scmp.ne.s32.totalorder %s68, %s82
    %p84 = scmp.eq.s32.totalorder %s16, 0
    %p85 = por %p83, %p84
    %s87 = sadd.s32 %s86, 1
    %p90 = scmp.eq.s32.totalorder %s10, 1
    %p91 = scmp.ne.s32.totalorder %s86, %s88
    %p92 = scmp.eq.s32.totalorder %s10, 0
    %p93 = por %p91, %p92
    %p94 = scmp.ne.s32.totalorder %s86, %s88
    %p95 = scmp.eq.s32.totalorder %s15, 1
    %p96 = por %p94, %p95
    %p97 = scmp.ne.s32.totalorder %s88, %s89
    %p98 = scmp.eq.s32.totalorder %s15, 0
    %p99 = por %p97, %p98
    %p100 = scmp.ne.s32.totalorder %s88, %s89
    %p101 = scmp.eq.s32.totalorder %s16, 1
    %p102 = por %p100, %p101
    %p104 = scmp.ne.s32.totalorder %s89, %s103
    %p105 = scmp.eq.s32.totalorder %s16, 0
    %p106 = por %p104, %p105
    %s107 = ssub.s32 %s10, %s17
    %p108 = scmp.eq.s32.totalorder %s107, 0
    %s110 = sadd.s32 %s109, 1
    %s111 = scalar_select %p108, %s109, %s110
    %p114 = pneg %p108
    %p115 = scmp.eq.s32.totalorder %s10, 1
    %p116 = por %p114, %p115
    %p117 = scmp.ne.s32.totalorder %s109, %s112
    %p118 = scmp.eq.s32.totalorder %s10, 0
    %p119 = por %p117, %p118
    %p120 = scmp.ne.s32.totalorder %s109, %s112
    %p121 = scmp.eq.s32.totalorder %s15, 1
    %p122 = por %p120, %p121
    %p123 = scmp.ne.s32.totalorder %s112, %s113
    %p124 = scmp.eq.s32.totalorder %s15, 0
    %p125 = por %p123, %p124
    %p126 = scmp.ne.s32.totalorder %s112, %s113
    %p127 = scmp.eq.s32.totalorder %s16, 1
    %p128 = por %p126, %p127
    %p130 = scmp.ne.s32.totalorder %s113, %s129
    %p131 = scmp.eq.s32.totalorder %s16, 0
    %p132 = por %p130, %p131
    %p133 = scmp.le.s32.totalorder 1, %s10
    %p134 = scmp.lt.s32.totalorder %s10, 3
    %p135 = pnand %p133, %p134
    %p136 = pneg %p135
    // Predicated region
    $region9: #{tpu_custom_call.1} parent=5 // pred_check
      _
    $region10: #{tpu_custom_call.1} parent=5 // pred_check_branch
      %138 = sbr.rel (%p135) target = $region12
    $region11: #{tpu_custom_call.1} parent=5 // pred_region
      %s139 = ssub.s32 %s10, 1
      // Predicated region
      $region13: #{tpu_custom_call.1} parent=11 // pred_check
        %p140 = pneg %p57
      $region14: #{tpu_custom_call.1} parent=11 // pred_check_branch
        %142 = sbr.rel (%p140) target = $region16
      $region15: #{tpu_custom_call.1} parent=11 // pred_region
        _
      $region16: #{tpu_custom_call.1} parent=11 // pred_fallthru
        _
      // Predicated region
      $region17: #{tpu_custom_call.1} parent=11 // pred_check
        %p143 = pneg %p78
      $region18: #{tpu_custom_call.1} parent=11 // pred_check_branch
        %145 = sbr.rel (%p143) target = $region20
      $region19: #{tpu_custom_call.1} parent=11 // pred_region
        _
      $region20: #{tpu_custom_call.1} parent=11 // pred_fallthru
        _
      // Predicated region
      $region21: #{tpu_custom_call.1} parent=11 // pred_check
        %p146 = pneg %p99
      $region22: #{tpu_custom_call.1} parent=11 // pred_check_branch
        %148 = sbr.rel (%p146) target = $region24
      $region23: #{tpu_custom_call.1} parent=11 // pred_region
        _
      $region24: #{tpu_custom_call.1} parent=11 // pred_fallthru
        _
    $region12: #{tpu_custom_call.1} parent=5 // pred_fallthru
      _
    %p149 = scmp.lt.s32.totalorder %s10, 2
    // Predicated region
    $region25: #{tpu_custom_call.1} parent=5 // pred_check
      %p150 = pneg %p149
    $region26: #{tpu_custom_call.1} parent=5 // pred_check_branch
      %152 = sbr.rel (%p150) target = $region28
    $region27: #{tpu_custom_call.1} parent=5 // pred_region
      // Predicated region
      $region29: #{tpu_custom_call.1} parent=27 // pred_check
        %p153 = pneg %p30
      $region30: #{tpu_custom_call.1} parent=27 // pred_check_branch
        %155 = sbr.rel (%p153) target = $region32
      $region31: #{tpu_custom_call.1} parent=27 // pred_region
        %p156 = scmp.lt.s32.totalorder %s10, 1
        %s157 = scalar_select %p156, %s10, 1
        %s158 = smul.addr %s157, 3
        %s159 = smul.addr %s158, 8
        %s160 = scalar_lea.vmem %s0, %s159
      $region32: #{tpu_custom_call.1} parent=27 // pred_fallthru
        _
    $region28: #{tpu_custom_call.1} parent=5 // pred_fallthru
      _
    %p161 = scmp.le.s32.totalorder 1, %s10
    %p162 = scmp.lt.s32.totalorder %s10, 3
    %p163 = pnand %p161, %p162
    %p164 = pneg %p163
    // Predicated region
    $region33: #{tpu_custom_call.1} parent=5 // pred_check
      _
    $region34: #{tpu_custom_call.1} parent=5 // pred_check_branch
      %166 = sbr.rel (%p163) target = $region36
    $region35: #{tpu_custom_call.1} parent=5 // pred_region
      %s167 = ssub.s32 %s10, 1
      %p168 = scmp.lt.s32.totalorder %s15, 1
      %s169 = scalar_select %p168, %s15, 1
      %s170 = smul.addr %s169, 3
      %s171 = smul.addr %s170, 8
      %s172 = scalar_lea.vmem %s0, %s171
      %p173 = pneg %p36
      %p174 = pneg %p33
      %p175 = pneg %p57
      %p176 = pneg %p54
      %p177 = pneg %p78
      %p178 = pneg %p75
      %p179 = pneg %p99
      %p180 = pneg %p96
      %p181 = pneg %p125
      %p182 = pneg %p122
      %p183 = scmp.lt.s32.totalorder %s15, 1
      %s184 = scalar_select %p183, %s15, 1
      %s185 = smul.addr %s184, 3
      %s186 = smul.addr %s185, 8
      %s187 = scalar_lea.vmem %s4, %s186
      %p188 = scmp.lt.s32.totalorder %s15, 1
      %s189 = scalar_select %p188, %s15, 1
      %s190 = smul.addr %s189, 3
      %s191 = smul.addr %s190, 8
      %s192 = scalar_lea.vmem %s0, %s191
      %p193 = scmp.lt.s32.totalorder %s15, 1
      %s194 = scalar_select %p193, %s15, 1
      %s195 = smul.addr %s194, 3
      %s196 = smul.addr %s195, 8
      %s197 = scalar_lea.vmem %s4, %s196
      %v198 = vld [vmem:[%s192] sm:$0xff]
      %v199 = vld [vmem:[%s192 + $0x8] sm:$0xff]
      %v200 = vld [vmem:[%s192 + $0x10] sm:$0x1]
      %v201 = vld [vmem:[%s1] sm:$0xff]
      %v202 = vld [vmem:[%s1 + $0x8] sm:$0xff]
      %v203 = vld [vmem:[%s1 + $0x10] sm:$0xff]
      %v204 = vld [vmem:[%s1 + $0x18] sm:$0xff]
      %v205 = vld [vmem:[%s1 + $0x20] sm:$0xff]
      %v206 = vld [vmem:[%s1 + $0x28] sm:$0xff]
      %v207 = vld [vmem:[%s1 + $0x30] sm:$0xff]
      %v208 = vld [vmem:[%s1 + $0x38] sm:$0xff]
      %vm209 = vcmask 523264
      %v211 = vsel %vm209, %v198, 0
      %v214 = vsel %vm209, %v199, 0
      %v217 = vsel %vm209, %v200, 0
      %219 = vmatprep.subr.mxu0 0.0
      %220 = vmatpush1.msra.mxu0 %v201
      %221 = vmatprep.subr.mxu0 0.0
      %222 = vmatpush1.msra.mxu0 %v202
      %223 = vmatprep.subr.mxu0 0.0
      %224 = vmatpush1.msra.mxu0 %v203
      %225 = vmatprep.subr.mxu0 0.0
      %226 = vmatpush1.msra.mxu0 %v204
      %227 = vmatprep.subr.mxu0 0.0
      %228 = vmatpush1.msra.mxu0 %v205
      %229 = vmatprep.subr.mxu0 0.0
      %230 = vmatpush1.msra.mxu0 %v206
      %231 = vmatprep.subr.mxu0 0.0
      %232 = vmatpush1.msra.mxu0 %v207
      %233 = vmatprep.subr.mxu0 0.0
      %234 = vmatpush1.msra.mxu0 %v208
      %235 = vmatprep.subr.mxu0 0.0
      %236 = vmatpush1.msra.mxu0 0.0
      %237 = vmatprep.subr.mxu0 0.0
      %238 = vmatpush1.msra.mxu0 0.0
      %239 = vmatprep.subr.mxu0 0.0
      %240 = vmatpush1.msra.mxu0 0.0
      %241 = vmatprep.subr.mxu0 0.0
      %242 = vmatpush1.msra.mxu0 0.0
      %243 = vmatprep.subr.mxu0 0.0
      %244 = vmatpush1.msra.mxu0 0.0
      %245 = vmatprep.subr.mxu0 0.0
      %246 = vmatpush1.msra.mxu0 0.0
      %247 = vmatprep.subr.mxu0 0.0
      %248 = vmatpush1.msra.mxu0 0.0
      %249 = vmatprep.subr.mxu0 0.0
      %250 = vmatpush1.msra.mxu0 0.0
      %251 = vmatprep.subr.mxu0 0.0
      %252 = vmatpush1.msra.mxu0 0.0
      %253 = vmatprep.subr.mxu0 0.0
      %254 = vmatpush1.msra.mxu0 0.0
      %255 = vmatprep.subr.mxu0 0.0
      %256 = vmatpush1.msra.mxu0 0.0
      %257 = vmatprep.subr.mxu0 0.0
      %258 = vmatpush1.msra.mxu0 0.0
      %259 = vmatprep.subr.mxu0 0.0
      %260 = vmatpush1.msra.mxu0 0.0
      %261 = vmatprep.subr.mxu0 0.0
      %262 = vmatpush1.msra.mxu0 0.0
      %263 = vmatprep.subr.mxu0 0.0
      %264 = vmatpush1.msra.mxu0 0.0
      %265 = vmatprep.subr.mxu0 0.0
      %266 = vmatpush1.msra.mxu0 0.0
      %267 = vmatprep.subr.mxu0 0.0
      %268 = vmatpush1.msra.mxu0 0.0
      %269 = vmatprep.subr.mxu0 0.0
      %270 = vmatpush1.msra.mxu0 0.0
      %271 = vmatprep.subr.mxu0 0.0
      %272 = vmatpush1.msra.mxu0 0.0
      %273 = vmatprep.subr.mxu0 0.0
      %274 = vmatpush1.msra.mxu0 0.0
      %275 = vmatprep.subr.mxu0 0.0
      %276 = vmatpush1.msra.mxu0 0.0
      %277 = vmatprep.subr.mxu0 0.0
      %278 = vmatpush1.msra.mxu0 0.0
      %279 = vmatprep.subr.mxu0 0.0
      %280 = vmatpush1.msra.mxu0 0.0
      %281 = vmatprep.subr.mxu0 0.0
      %282 = vmatpush1.msra.mxu0 0.0
      %283 = vmatprep.mubr.f32.mxu0 0.0
      %284 = vmatmul.mubr.f32.gmra.mrb[0].mxu0 %v211
      %v285 = vpop.f32.mrb[0].mxu0
      %v286 = vadd.f32 0.0, %v285
      %v287 = vpop.f32.mrb[0].mxu0
      %288 = vmatprep.mubr.f32.mxu0 0.0
      %289 = vmatmul.mubr.f32.gmra.mrb[0].mxu0 %v214
      %v290 = vpop.f32.mrb[0].mxu0
      %v291 = vadd.f32 0.0, %v290
      %v292 = vpop.f32.mrb[0].mxu0
      %293 = vmatprep.mubr.f32.mxu0 0.0
      %294 = vmatmul.mubr.f32.gmra.mrb[0].mxu0 %v217
      %v295 = vpop.f32.mrb[0].mxu0
      %v296 = vadd.f32 0.0, %v295
      %v297 = vpop.f32.mrb[0].mxu0
      %298 = vdwg.mxu0
      %vm299 = vcmask 261120
      %300 = vst.msk [vmem:[#allocation2] sm:$0xff] %vm299, %v286
      %301 = vst.msk [vmem:[#allocation2 + $0x8] sm:$0xff] %vm299, %v291
      %vm302 = vcmask 253952
      %303 = vst.msk [vmem:[#allocation2 + $0x10] sm:$0x1] %vm302, %v296
      %v304 = vld [vmem:[#allocation2] sm:$0xff]
      %v305 = vld [vmem:[#allocation2 + $0x8] sm:$0xff]
      %v306 = vld [vmem:[#allocation2 + $0x10] sm:$0x1]
      %v307 = vld [vmem:[%s2] sm:$0x1]
      %v309 = vlaneseq
      %v310 = vshrl.u32 %v309, 7
      %v311 = vsub.s32 0, %v310
      %v312 = vrot.slane %v307, %v311
      %v314 = vadd.f32 %v304, %v312
      %v315 = vadd.f32 %v305, %v312
      %v316 = vadd.f32 %v306, %v312
      %v317 = vlaneseq
      %v318 = vshrl.u32 %v317, 7
      %v319 = vadd.s32 %v318, 8
      %v320 = vadd.s32 %v318, 16
      %vm321 = vcmp.eq.s32.totalorder %v318, 0
      %vm322 = vcmp.eq.s32.totalorder %v319, 0
      %vm323 = vcmp.eq.s32.totalorder %v320, 0
      %v324 = vld [vmem:[%s3] sm:$0x1]
      %v326 = vlaneseq
      %v327 = vshrl.u32 %v326, 7
      %v328 = vsub.s32 0, %v327
      %v329 = vrot.slane %v324, %v328
      %v331 = vsel %vm321, %v329, %v314
      %v332 = vsel %vm322, %v329, %v315
      %v333 = vsel %vm323, %v329, %v316
      %334 = vst.msk [vmem:[%s197] sm:$0xff] %vm299, %v331
      %335 = vst.msk [vmem:[%s197 + $0x8] sm:$0xff] %vm299, %v332
      %336 = vst.msk [vmem:[%s197 + $0x10] sm:$0x1] %vm302, %v333
      %p337 = scmp.lt.s32.totalorder %s15, 1
      %s338 = scalar_select %p337, %s15, 1
      %s339 = smul.addr %s338, 3
      %s340 = smul.addr %s339, 8
      %s341 = scalar_lea.vmem %s4, %s340
      // Predicated region
      $region37: #{tpu_custom_call.1} parent=35 // pred_check
        %p342 = pneg %p122
      $region38: #{tpu_custom_call.1} parent=35 // pred_check_branch
        %344 = sbr.rel (%p342) target = $region40
      $region39: #{tpu_custom_call.1} parent=35 // pred_region
        _
      $region40: #{tpu_custom_call.1} parent=35 // pred_fallthru
        _
    $region36: #{tpu_custom_call.1} parent=5 // pred_fallthru
      _
    %p345 = scmp.le.s32.totalorder 2, %s10
    // Predicated region
    $region41: #{tpu_custom_call.1} parent=5 // pred_check
      %p346 = pneg %p345
    $region42: #{tpu_custom_call.1} parent=5 // pred_check_branch
      %348 = sbr.rel (%p346) target = $region44
    $region43: #{tpu_custom_call.1} parent=5 // pred_region
      %s349 = ssub.s32 %s10, 2
      // Predicated region
      $region45: #{tpu_custom_call.1} parent=43 // pred_check
        %p350 = pneg %p128
      $region46: #{tpu_custom_call.1} parent=43 // pred_check_branch
        %352 = sbr.rel (%p350) target = $region48
      $region47: #{tpu_custom_call.1} parent=43 // pred_region
        %p353 = scmp.lt.s32.totalorder %s16, 1
        %s354 = scalar_select %p353, %s16, 1
        %s355 = smul.addr %s354, 3
        %s356 = smul.addr %s355, 8
        %s357 = scalar_lea.vmem %s4, %s356
      $region48: #{tpu_custom_call.1} parent=43 // pred_fallthru
        _
    $region44: #{tpu_custom_call.1} parent=5 // pred_fallthru
      _
  $region6: #{tpu_custom_call.1} parent=0 // loop_footer
    %s14 = sadd.s32 1, %s10
  $region7: #{tpu_custom_call.1} parent=0 // loop_footer_branch
    %9 = sbr.rel target = $region3
  $region8: #{tpu_custom_call.1} parent=0 // loop_exit
    _

</llo_original>
